<compile_context>
chip_gen: v6e
topology: v6e:2x2x1
jax: 0.10.0
libtpu: 0.0.40
codegen_flags: <defaults>
</compile_context>

<pallas_src>
import jax
import jax.numpy as jnp
from jax import lax
from jax.experimental import pallas as pl
from jax.experimental.pallas import tpu as pltpu


def _kkt_kernel(x_ref, ly_ref, w100_ref, b100_ref, w_ref, v_ref,
                out_ref, acc_ref):
    ni = pl.program_id(1)

    @pl.when(ni == 0)
    def _():
        acc_ref[...] = jnp.zeros_like(acc_ref)

    x = x_ref[...]                                           # (nt, d)

    # s = 100*(w @ x.T + b); the 100 is pre-folded into w100 / b100.
    s = lax.dot_general(w100_ref[...], x, (((1,), (1,)), ((), ())),
                        preferred_element_type=jnp.float32) + b100_ref[...]
    # lax.logistic rides the EUP (exp/tanh slot) — free next to the MXU work.
    sigma_prime = jax.nn.sigmoid(s)                          # (jt, nt)

    # Fold lambdas*y into sigma_prime: lane-aligned (1, nt) row broadcast.
    scaled = sigma_prime * ly_ref[...]                       # (jt, nt)

    # weighted_sum accumulation: (jt, nt) @ (nt, d) -> (jt, d)
    acc_ref[...] += jnp.dot(scaled, x, preferred_element_type=jnp.float32)

    @pl.when(ni == pl.num_programs(1) - 1)
    def _():
        diff = w_ref[...] - v_ref[...] * acc_ref[...]        # (jt, d)
        out_ref[...] = diff * diff                           # lane-dense tile


def kkt_loss(x, targets, lambdas, w, b, v, *, n_tile=512):
    """x: (n, d); targets, lambdas: (n,); w: (j, d); b: (j,); v: (1, j)."""
    x = x.astype(jnp.float32)
    targets = targets.astype(jnp.float32)
    lambdas = lambdas.astype(jnp.float32)
    w = w.astype(jnp.float32)
    b = b.astype(jnp.float32)
    v = v.astype(jnp.float32)

    n, d = x.shape
    j = w.shape[0]

    # forward(): `if 0 in targets: targets = 2*targets - 1`
    # Global predicate over n — must be decided outside the tiled kernel.
    y = jnp.where(jnp.any(targets == 0.0), 2.0 * targets - 1.0, targets)
    ly = (lambdas * y).reshape(1, n)                 # (1, n) lane-aligned row

    # Fold the 100x sharpening into the small, n-resident parameters.
    w100 = 100.0 * w                                 # (j, d)
    b100 = (100.0 * b).reshape(j, 1)                 # (j, 1)
    v_col = v.reshape(j, 1)                          # layers.1.weight.T

    # n-tiling: stream x / ly over the reduction axis.
    if n <= n_tile:
        nt, gn, n_tot = n, 1, n
    else:
        assert n_tile % 128 == 0, "n_tile must be lane-aligned"
        nt = n_tile
        gn = pl.cdiv(n, nt)
        n_tot = gn * nt
        pad = n_tot - n
        if pad:
            x = jnp.pad(x, ((0, pad), (0, 0)))
            ly = jnp.pad(ly, ((0, 0), (0, pad)))     # zero ly => zero contrib

    # 2-way parallel split over j (uses both TensorCores on v7x).
    if j % 16 == 0:
        jt, gj = j // 2, 2
    else:
        jt, gj = j, 1

    flops = 4 * j * n_tot * d + 4 * j * n_tot + 3 * j * d
    transcendentals = j * n_tot
    bytes_accessed = 4 * (n_tot * d + n_tot + 4 * j * d + 2 * j)

    out_sq = pl.pallas_call(
        _kkt_kernel,
        out_shape=jax.ShapeDtypeStruct((j, d), jnp.float32),
        grid_spec=pltpu.PrefetchScalarGridSpec(
            num_scalar_prefetch=0,
            grid=(gj, gn),
            in_specs=[
                pl.BlockSpec((nt, d), lambda ji, ni: (ni, 0)),   # x tile
                pl.BlockSpec((1, nt), lambda ji, ni: (0, ni)),   # lambdas*y row
                pl.BlockSpec((jt, d), lambda ji, ni: (ji, 0)),   # 100*w
                pl.BlockSpec((jt, 1), lambda ji, ni: (ji, 0)),   # 100*b
                pl.BlockSpec((jt, d), lambda ji, ni: (ji, 0)),   # w
                pl.BlockSpec((jt, 1), lambda ji, ni: (ji, 0)),   # v.T
            ],
            out_specs=pl.BlockSpec((jt, d), lambda ji, ni: (ji, 0)),
            scratch_shapes=[pltpu.VMEM((jt, d), jnp.float32)],   # weighted_sum
        ),
        compiler_params=pltpu.CompilerParams(
            dimension_semantics=("parallel", "arbitrary"),
            vmem_limit_bytes=40 * 1024 * 1024,   # above v5e's 16 MiB default,
                                                 # well under v7x's 64 MiB phys
        ),
        cost_estimate=pl.CostEstimate(
            flops=flops,
            transcendentals=transcendentals,
            bytes_accessed=bytes_accessed,
        ),
    )(x, ly, w100, b100, w, v_col)

    # Tiny (j, d) reduce in the wrapper — cheaper and more robust than a
    # masked 1-lane scalar store per output block.
    return jnp.sum(out_sq)


def kkt_loss_reference(x, targets, lambdas, w, b, v):
    """Plain-JAX mirror of the PyTorch forward, for verification."""
    t = jnp.where(jnp.any(targets == 0.0), 2.0 * targets - 1.0, targets)
    wxb = w @ x.T + b[:, None]
    sigma_prime = jax.nn.sigmoid(100.0 * wxb)
    modified_x = x * lambdas[:, None] * t[:, None]
    weighted_sum = jnp.einsum('nd,jn->jd', modified_x, sigma_prime)
    term = v.T * weighted_sum
    return jnp.sum((w - term) ** 2)


if __name__ == "__main__":
    key = jax.random.PRNGKey(0)

    def make_case(k, n, d, j):
        kx, kt, kl, kw, kb, kv = jax.random.split(k, 6)
        x = jax.random.normal(kx, (n, d), dtype=jnp.float32)
        # targets in {0, 1} to exercise the `2*targets - 1` branch
        targets = jax.random.bernoulli(kt, 0.5, (n,)).astype(jnp.float32)
        lambdas = jax.random.uniform(kl, (n,), dtype=jnp.float32)
        # AttackedModel params: layers.0 Linear(d->j), layers.1 Linear(j->1)
        w = 0.1 * jax.random.normal(kw, (j, d), dtype=jnp.float32)
        b = 0.1 * jax.random.normal(kb, (j,), dtype=jnp.float32)
        v = 0.1 * jax.random.normal(kv, (1, j), dtype=jnp.float32)
        return x, targets, lambdas, w, b, v

    k1, k2 = jax.random.split(key)

    # Small shapes implied by the module: n samples, d features, j hidden.
    args = make_case(k1, n=8, d=32, j=16)
    loss = kkt_loss(*args)
    jax.block_until_ready(loss)
    ref = kkt_loss_reference(*args)
    assert jnp.allclose(loss, ref, rtol=1e-4, atol=1e-5), (loss, ref)

    # Exercise the streamed / padded reduction path and the parallel j split.
    args = make_case(k2, n=1200, d=128, j=32)
    loss = kkt_loss(*args, n_tile=512)
    jax.block_until_ready(loss)
    ref = kkt_loss_reference(*args)
    assert jnp.allclose(loss, ref, rtol=1e-4, atol=1e-5), (loss, ref)

    print("KERNEL_OK")
</pallas_src>

<mosaic_0001>
module attributes {stable_mosaic.version = 11 : i64} {
  func.func @_kkt_kernel(%arg0: i32, %arg1: i32, %arg2: memref<8x32xf32, #tpu.memory_space<vmem>>, %arg3: memref<1x8xf32, #tpu.memory_space<vmem>>, %arg4: memref<8x32xf32, #tpu.memory_space<vmem>>, %arg5: memref<8x1xf32, #tpu.memory_space<vmem>>, %arg6: memref<8x32xf32, #tpu.memory_space<vmem>>, %arg7: memref<8x1xf32, #tpu.memory_space<vmem>>, %arg8: memref<8x32xf32, #tpu.memory_space<vmem>>, %arg9: memref<8x32xf32, #tpu.memory_space<vmem>>) attributes {dimension_semantics = [#tpu.dimension_semantics<parallel>, #tpu.dimension_semantics<arbitrary>], iteration_bounds = array<i64: 2, 1>, scalar_prefetch = 0 : i64, scratch_operands = 1 : i64, tpu.core_type = #tpu.core_type<tc>, window_params = [{transform_indices = @transform_0, window_bounds = array<i64: 8, 32>}, {transform_indices = @transform_1, window_bounds = array<i64: 1, 8>}, {transform_indices = @transform_2, window_bounds = array<i64: 8, 32>}, {transform_indices = @transform_3, window_bounds = array<i64: 8, 1>}, {transform_indices = @transform_4, window_bounds = array<i64: 8, 32>}, {transform_indices = @transform_5, window_bounds = array<i64: 8, 1>}, {transform_indices = @transform_6, window_bounds = array<i64: 8, 32>}]} {
    %c0_i32 = arith.constant 0 : i32
    %0 = arith.cmpi eq, %arg1, %c0_i32 : i32
    %1 = arith.extui %0 : i1 to i32
    %c0_i32_0 = arith.constant 0 : i32
    %2 = arith.cmpi ne, %1, %c0_i32_0 : i32
    scf.if %2 {
      %cst_16 = arith.constant 0.000000e+00 : f32
      %24 = vector.broadcast %cst_16 : f32 to vector<8x32xf32>
      %c0_17 = arith.constant 0 : index
      %c0_18 = arith.constant 0 : index
      %25 = vector.load %arg9[%c0_17, %c0_18] : memref<8x32xf32, #tpu.memory_space<vmem>>, vector<8x32xf32>
      tpu.vector_store %arg9[%c0_17, %c0_18], %24 {strides = array<i32>} : memref<8x32xf32, #tpu.memory_space<vmem>>, vector<8x32xf32>,
    } else {
    }
    %c0 = arith.constant 0 : index
    %c0_1 = arith.constant 0 : index
    %3 = vector.load %arg2[%c0, %c0_1] : memref<8x32xf32, #tpu.memory_space<vmem>>, vector<8x32xf32>
    %c0_2 = arith.constant 0 : index
    %c0_3 = arith.constant 0 : index
    %4 = vector.load %arg4[%c0_2, %c0_3] : memref<8x32xf32, #tpu.memory_space<vmem>>, vector<8x32xf32>
    %cst = arith.constant dense<0.000000e+00> : vector<8x8xf32>
    %5 = tpu.matmul %4, %3, %cst {dimension_numbers = #tpu.dot_dimension_numbers<[1], [1], [0], [0], [0, 0, 1, 0], [], []>} : vector<8x32xf32>, vector<8x32xf32>, vector<8x8xf32> -> vector<8x8xf32>
    %c0_4 = arith.constant 0 : index
    %c0_5 = arith.constant 0 : index
    %6 = vector.load %arg5[%c0_4, %c0_5] : memref<8x1xf32, #tpu.memory_space<vmem>>, vector<8x1xf32>
    %7 = vector.broadcast %6 : vector<8x1xf32> to vector<8x8xf32>
    %8 = arith.addf %5, %7 : vector<8x8xf32>
    %9 = arith.negf %8 : vector<8x8xf32>
    %10 = math.exp %9 : vector<8x8xf32>
    %cst_6 = arith.constant 1.000000e+00 : f32
    %11 = vector.broadcast %cst_6 : f32 to vector<8x8xf32>
    %12 = arith.addf %11, %10 : vector<8x8xf32>
    %13 = arith.divf %11, %12 : vector<8x8xf32>
    %c0_7 = arith.constant 0 : index
    %c0_8 = arith.constant 0 : index
    %14 = vector.load %arg3[%c0_7, %c0_8] : memref<1x8xf32, #tpu.memory_space<vmem>>, vector<1x8xf32>
    %15 = vector.broadcast %14 : vector<1x8xf32> to vector<8x8xf32>
    %16 = arith.mulf %13, %15 : vector<8x8xf32>
    %c0_9 = arith.constant 0 : index
    %c0_10 = arith.constant 0 : index
    %17 = vector.load %arg9[%c0_9, %c0_10] : memref<8x32xf32, #tpu.memory_space<vmem>>, vector<8x32xf32>
    %cst_11 = arith.constant dense<0.000000e+00> : vector<8x32xf32>
    %18 = tpu.matmul %16, %3, %cst_11 {dimension_numbers = #tpu.dot_dimension_numbers<[1], [0], [0], [1], [0, 0, 1, 1], [], []>} : vector<8x8xf32>, vector<8x32xf32>, vector<8x32xf32> -> vector<8x32xf32>
    %19 = arith.addf %17, %18 : vector<8x32xf32>
    %c0_12 = arith.constant 0 : index
    %c0_13 = arith.constant 0 : index
    %20 = vector.load %arg9[%c0_12, %c0_13] : memref<8x32xf32, #tpu.memory_space<vmem>>, vector<8x32xf32>
    tpu.vector_store %arg9[%c0_12, %c0_13], %19 {strides = array<i32>} : memref<8x32xf32, #tpu.memory_space<vmem>>, vector<8x32xf32>,
    %c0_i32_14 = arith.constant 0 : i32
    %21 = arith.cmpi eq, %arg1, %c0_i32_14 : i32
    %22 = arith.extui %21 : i1 to i32
    %c0_i32_15 = arith.constant 0 : i32
    %23 = arith.cmpi ne, %22, %c0_i32_15 : i32
    scf.if %23 {
      %c0_16 = arith.constant 0 : index
      %c0_17 = arith.constant 0 : index
      %24 = vector.load %arg6[%c0_16, %c0_17] : memref<8x32xf32, #tpu.memory_space<vmem>>, vector<8x32xf32>
      %c0_18 = arith.constant 0 : index
      %c0_19 = arith.constant 0 : index
      %25 = vector.load %arg7[%c0_18, %c0_19] : memref<8x1xf32, #tpu.memory_space<vmem>>, vector<8x1xf32>
      %c0_20 = arith.constant 0 : index
      %c0_21 = arith.constant 0 : index
      %26 = vector.load %arg9[%c0_20, %c0_21] : memref<8x32xf32, #tpu.memory_space<vmem>>, vector<8x32xf32>
      %27 = vector.broadcast %25 : vector<8x1xf32> to vector<8x32xf32>
      %28 = arith.mulf %27, %26 : vector<8x32xf32>
      %29 = arith.subf %24, %28 : vector<8x32xf32>
      %30 = arith.mulf %29, %29 : vector<8x32xf32>
      %c0_22 = arith.constant 0 : index
      %c0_23 = arith.constant 0 : index
      %31 = vector.load %arg8[%c0_22, %c0_23] : memref<8x32xf32, #tpu.memory_space<vmem>>, vector<8x32xf32>
      tpu.vector_store %arg8[%c0_22, %c0_23], %30 {strides = array<i32>} : memref<8x32xf32, #tpu.memory_space<vmem>>, vector<8x32xf32>,
    } else {
    }
    return
  }
  func.func @transform_0(%arg0: i32, %arg1: i32) -> (i32, i32) {
    %c0_i32 = arith.constant 0 : i32
    %c0_i32_0 = arith.constant 0 : i32
    return %arg1, %c0_i32 : i32, i32
  }
  func.func @transform_1(%arg0: i32, %arg1: i32) -> (i32, i32) {
    %c0_i32 = arith.constant 0 : i32
    %c0_i32_0 = arith.constant 0 : i32
    return %c0_i32, %arg1 : i32, i32
  }
  func.func @transform_2(%arg0: i32, %arg1: i32) -> (i32, i32) {
    %c0_i32 = arith.constant 0 : i32
    %c0_i32_0 = arith.constant 0 : i32
    return %arg0, %c0_i32 : i32, i32
  }
  func.func @transform_3(%arg0: i32, %arg1: i32) -> (i32, i32) {
    %c0_i32 = arith.constant 0 : i32
    %c0_i32_0 = arith.constant 0 : i32
    return %arg0, %c0_i32 : i32, i32
  }
  func.func @transform_4(%arg0: i32, %arg1: i32) -> (i32, i32) {
    %c0_i32 = arith.constant 0 : i32
    %c0_i32_0 = arith.constant 0 : i32
    return %arg0, %c0_i32 : i32, i32
  }
  func.func @transform_5(%arg0: i32, %arg1: i32) -> (i32, i32) {
    %c0_i32 = arith.constant 0 : i32
    %c0_i32_0 = arith.constant 0 : i32
    return %arg0, %c0_i32 : i32, i32
  }
  func.func @transform_6(%arg0: i32, %arg1: i32) -> (i32, i32) {
    %c0_i32 = arith.constant 0 : i32
    %c0_i32_0 = arith.constant 0 : i32
    return %arg0, %c0_i32 : i32, i32
  }
}

</mosaic_0001>

<llo_original>
// kernel: tpu_custom_call.1
$region0: #{tpu_custom_call.1}
  #allocation0 [shape = 'u32[]', space=smem, size = 0x4, offset = 0x4, fixed_abs, tag = 'smem constant byte address 0x4 - core index']
  #allocation1 [shape = 'u32[144,128]{1,0:T(1,128)}', space=vmem, size = 0x12000, scoped, tag = 'internal scratch']
  #allocation2 [shape = 'f32[8,32]{1,0:T(8,128)}', space=vmem, size = 0x1000, scoped, tag = 'scratch operand']
  %s0 = inlined_call_operand.hbm [shape: f32[8,32], index: 0, kind: input, shape index: {}]
  %s1 = inlined_call_operand.vmem [shape: f32[1,8], index: 1, kind: input, shape index: {}]
  %s2 = inlined_call_operand.vmem [shape: f32[16,32], index: 2, kind: input, shape index: {}]
  %s3 = inlined_call_operand.vmem [shape: f32[16,1], index: 3, kind: input, shape index: {}]
  %s4 = inlined_call_operand.vmem [shape: f32[16,32], index: 4, kind: input, shape index: {}]
  %s5 = inlined_call_operand.vmem [shape: f32[16,1], index: 5, kind: input, shape index: {}]
  %s6 = inlined_call_operand.hbm [shape: f32[16,32], index: 6, kind: output, shape index: {}]
  %s7 = sld [smem:[#allocation0]]
  $region69: #{tpu_custom_call.1} parent=0
    _
  %s9 = ssub.s32 1, %s7
  %s10 = scalar_select 0, %s9, %s7
  $region1: #{tpu_custom_call.1} parent=0
    #allocation3 [shape = 'u8[4096]{0}', space=vmem, size = 0x1000, scoped, tag = 'input window, operand 0, single buffered']
    #allocation4 [shape = 's32[2]{0}', space=sflag, size = 0x8, scoped, tag = 'scoped memory for tpu_custom_call.1']
    #allocation5 [shape = 's32[2]{0}', space=sflag, size = 0x8, scoped, tag = 'scoped memory for tpu_custom_call.1']
    #allocation6 [shape = 'u8[8192]{0}', space=vmem, size = 0x2000, scoped, tag = 'output window, operand 0']
    %11 = vsyncpa [#allocation4], 0
    %12 = vsyncpa [#allocation5], 0
    %s13 = scalar_lea.sflag [#allocation5], 1
    %14 = vsyncpa %s13, 0
    loop: start=0, step=1, limit=4
    $region2: #{tpu_custom_call.1} parent=1 // loop_pre_header
      _
    $region3: #{tpu_custom_call.1} parent=1 // loop_header
      %s16 = sphi 0, %s20
      %p17 = scmp.ge.s32.totalorder %s16, 4
      %s23 = sphi 0, %s35
      %s24 = sphi 0, %s31
      %s25 = sphi 0, %s23
      %s26 = sphi 0, %s24
      %s27 = sphi 0, %s25
      %s28 = sphi 0, %s26
      %s38 = sphi 0, %s40
      %s41 = sphi 0, %s38
      %s42 = sphi 0, %s41
      %s58 = sphi 0, %s42
      %s64 = sphi 0, %s66
      %s67 = sphi 0, %s64
      %s68 = sphi 0, %s67
      %s84 = sphi 0, %s68
      %s90 = sphi 0, %s92
      %s93 = sphi 0, %s90
      %s94 = sphi 0, %s93
      %s110 = sphi 0, %s94
      %s116 = sphi 0, %s118
      %s119 = sphi 0, %s116
      %s120 = sphi 0, %s119
      %s136 = sphi 0, %s120
      %s142 = sphi 0, %s144
      %s145 = sphi 0, %s142
      %s146 = sphi 0, %s145
      %s162 = sphi 0, %s146
      %s168 = sphi 0, %s170
      %s171 = sphi 0, %s168
      %s172 = sphi 0, %s171
      %s188 = sphi 0, %s172
      %s194 = sphi 0, %s196
      %s197 = sphi 0, %s194
      %s198 = sphi 0, %s197
      %s214 = sphi 0, %s198
    $region4: #{tpu_custom_call.1} parent=1 // loop_header_branch
      %19 = sbr.rel (%p17) target = $region8
    $region5: #{tpu_custom_call.1} parent=1 // loop_body
      %s21 = ssub.s32 %s16, 1
      %s22 = ssub.s32 %s16, 2
      %s29 = sadd.s32 1, %s24
      %p30 = scmp.ge.s32.totalorder %s29, 1
      %s31 = scalar_select %p30, 0, %s29
      %s32 = sadd.s32 1, %s23
      %s33 = scalar_select %p30, %s32, %s23
      %p34 = scmp.ge.s32.totalorder %s33, 2
      %s35 = scalar_select %p34, 0, %s33
      %s36 = ssub.s32 %s24, %s31
      %p37 = scmp.eq.s32.totalorder %s36, 0
      %s39 = sadd.s32 %s38, 1
      %s40 = scalar_select %p37, %s38, %s39
      %p43 = pneg %p37
      %p44 = scmp.eq.s32.totalorder %s16, 1
      %p45 = por %p43, %p44
      %p46 = scmp.ne.s32.totalorder %s38, %s41
      %p47 = scmp.eq.s32.totalorder %s16, 0
      %p48 = por %p46, %p47
      %p49 = scmp.ne.s32.totalorder %s38, %s41
      %p50 = scmp.eq.s32.totalorder %s21, 1
      %p51 = por %p49, %p50
      %p52 = scmp.ne.s32.totalorder %s41, %s42
      %p53 = scmp.eq.s32.totalorder %s21, 0
      %p54 = por %p52, %p53
      %p55 = scmp.ne.s32.totalorder %s41, %s42
      %p56 = scmp.eq.s32.totalorder %s22, 1
      %p57 = por %p55, %p56
      %p59 = scmp.ne.s32.totalorder %s42, %s58
      %p60 = scmp.eq.s32.totalorder %s22, 0
      %p61 = por %p59, %p60
      %s62 = ssub.s32 %s24, %s31
      %p63 = scmp.eq.s32.totalorder %s62, 0
      %s65 = sadd.s32 %s64, 1
      %s66 = scalar_select %p63, %s64, %s65
      %p69 = pneg %p63
      %p70 = scmp.eq.s32.totalorder %s16, 1
      %p71 = por %p69, %p70
      %p72 = scmp.ne.s32.totalorder %s64, %s67
      %p73 = scmp.eq.s32.totalorder %s16, 0
      %p74 = por %p72, %p73
      %p75 = scmp.ne.s32.totalorder %s64, %s67
      %p76 = scmp.eq.s32.totalorder %s21, 1
      %p77 = por %p75, %p76
      %p78 = scmp.ne.s32.totalorder %s67, %s68
      %p79 = scmp.eq.s32.totalorder %s21, 0
      %p80 = por %p78, %p79
      %p81 = scmp.ne.s32.totalorder %s67, %s68
      %p82 = scmp.eq.s32.totalorder %s22, 1
      %p83 = por %p81, %p82
      %p85 = scmp.ne.s32.totalorder %s68, %s84
      %p86 = scmp.eq.s32.totalorder %s22, 0
      %p87 = por %p85, %p86
      %s88 = ssub.s32 %s23, %s35
      %p89 = scmp.eq.s32.totalorder %s88, 0
      %s91 = sadd.s32 %s90, 1
      %s92 = scalar_select %p89, %s90, %s91
      %p95 = pneg %p89
      %p96 = scmp.eq.s32.totalorder %s16, 1
      %p97 = por %p95, %p96
      %p98 = scmp.ne.s32.totalorder %s90, %s93
      %p99 = scmp.eq.s32.totalorder %s16, 0
      %p100 = por %p98, %p99
      %p101 = scmp.ne.s32.totalorder %s90, %s93
      %p102 = scmp.eq.s32.totalorder %s21, 1
      %p103 = por %p101, %p102
      %p104 = scmp.ne.s32.totalorder %s93, %s94
      %p105 = scmp.eq.s32.totalorder %s21, 0
      %p106 = por %p104, %p105
      %p107 = scmp.ne.s32.totalorder %s93, %s94
      %p108 = scmp.eq.s32.totalorder %s22, 1
      %p109 = por %p107, %p108
      %p111 = scmp.ne.s32.totalorder %s94, %s110
      %p112 = scmp.eq.s32.totalorder %s22, 0
      %p113 = por %p111, %p112
      %s114 = ssub.s32 %s23, %s35
      %p115 = scmp.eq.s32.totalorder %s114, 0
      %s117 = sadd.s32 %s116, 1
      %s118 = scalar_select %p115, %s116, %s117
      %p121 = pneg %p115
      %p122 = scmp.eq.s32.totalorder %s16, 1
      %p123 = por %p121, %p122
      %p124 = scmp.ne.s32.totalorder %s116, %s119
      %p125 = scmp.eq.s32.totalorder %s16, 0
      %p126 = por %p124, %p125
      %p127 = scmp.ne.s32.totalorder %s116, %s119
      %p128 = scmp.eq.s32.totalorder %s21, 1
      %p129 = por %p127, %p128
      %p130 = scmp.ne.s32.totalorder %s119, %s120
      %p131 = scmp.eq.s32.totalorder %s21, 0
      %p132 = por %p130, %p131
      %p133 = scmp.ne.s32.totalorder %s119, %s120
      %p134 = scmp.eq.s32.totalorder %s22, 1
      %p135 = por %p133, %p134
      %p137 = scmp.ne.s32.totalorder %s120, %s136
      %p138 = scmp.eq.s32.totalorder %s22, 0
      %p139 = por %p137, %p138
      %s140 = ssub.s32 %s23, %s35
      %p141 = scmp.eq.s32.totalorder %s140, 0
      %s143 = sadd.s32 %s142, 1
      %s144 = scalar_select %p141, %s142, %s143
      %p147 = pneg %p141
      %p148 = scmp.eq.s32.totalorder %s16, 1
      %p149 = por %p147, %p148
      %p150 = scmp.ne.s32.totalorder %s142, %s145
      %p151 = scmp.eq.s32.totalorder %s16, 0
      %p152 = por %p150, %p151
      %p153 = scmp.ne.s32.totalorder %s142, %s145
      %p154 = scmp.eq.s32.totalorder %s21, 1
      %p155 = por %p153, %p154
      %p156 = scmp.ne.s32.totalorder %s145, %s146
      %p157 = scmp.eq.s32.totalorder %s21, 0
      %p158 = por %p156, %p157
      %p159 = scmp.ne.s32.totalorder %s145, %s146
      %p160 = scmp.eq.s32.totalorder %s22, 1
      %p161 = por %p159, %p160
      %p163 = scmp.ne.s32.totalorder %s146, %s162
      %p164 = scmp.eq.s32.totalorder %s22, 0
      %p165 = por %p163, %p164
      %s166 = ssub.s32 %s23, %s35
      %p167 = scmp.eq.s32.totalorder %s166, 0
      %s169 = sadd.s32 %s168, 1
      %s170 = scalar_select %p167, %s168, %s169
      %p173 = pneg %p167
      %p174 = scmp.eq.s32.totalorder %s16, 1
      %p175 = por %p173, %p174
      %p176 = scmp.ne.s32.totalorder %s168, %s171
      %p177 = scmp.eq.s32.totalorder %s16, 0
      %p178 = por %p176, %p177
      %p179 = scmp.ne.s32.totalorder %s168, %s171
      %p180 = scmp.eq.s32.totalorder %s21, 1
      %p181 = por %p179, %p180
      %p182 = scmp.ne.s32.totalorder %s171, %s172
      %p183 = scmp.eq.s32.totalorder %s21, 0
      %p184 = por %p182, %p183
      %p185 = scmp.ne.s32.totalorder %s171, %s172
      %p186 = scmp.eq.s32.totalorder %s22, 1
      %p187 = por %p185, %p186
      %p189 = scmp.ne.s32.totalorder %s172, %s188
      %p190 = scmp.eq.s32.totalorder %s22, 0
      %p191 = por %p189, %p190
      %s192 = ssub.s32 %s23, %s35
      %p193 = scmp.eq.s32.totalorder %s192, 0
      %s195 = sadd.s32 %s194, 1
      %s196 = scalar_select %p193, %s194, %s195
      %p199 = pneg %p193
      %p200 = scmp.eq.s32.totalorder %s16, 1
      %p201 = por %p199, %p200
      %p202 = scmp.ne.s32.totalorder %s194, %s197
      %p203 = scmp.eq.s32.totalorder %s16, 0
      %p204 = por %p202, %p203
      %p205 = scmp.ne.s32.totalorder %s194, %s197
      %p206 = scmp.eq.s32.totalorder %s21, 1
      %p207 = por %p205, %p206
      %p208 = scmp.ne.s32.totalorder %s197, %s198
      %p209 = scmp.eq.s32.totalorder %s21, 0
      %p210 = por %p208, %p209
      %p211 = scmp.ne.s32.totalorder %s197, %s198
      %p212 = scmp.eq.s32.totalorder %s22, 1
      %p213 = por %p211, %p212
      %p215 = scmp.ne.s32.totalorder %s198, %s214
      %p216 = scmp.eq.s32.totalorder %s22, 0
      %p217 = por %p215, %p216
      %p218 = scmp.le.s32.totalorder 1, %s16
      %p219 = scmp.lt.s32.totalorder %s16, 3
      %p220 = pnand %p218, %p219
      %p221 = pneg %p220
      // Predicated region
      $region9: #{tpu_custom_call.1} parent=5 // pred_check
        _
      $region10: #{tpu_custom_call.1} parent=5 // pred_check_branch
        %223 = sbr.rel (%p220) target = $region12
      $region11: #{tpu_custom_call.1} parent=5 // pred_region
        %s224 = ssub.s32 %s16, 1
        // Predicated region
        $region13: #{tpu_custom_call.1} parent=11 // pred_check
          %p225 = pneg %p54
        $region14: #{tpu_custom_call.1} parent=11 // pred_check_branch
          %227 = sbr.rel (%p225) target = $region16
        $region15: #{tpu_custom_call.1} parent=11 // pred_region
          %s229 = ssub.s32 128, 128
          %230 = vsyncadd [#allocation4], %s229
          %s231 = smul.addr %s26, 128
          %s232 = scalar_lea.hbm %s0, %s231
          %s234 = sshll.u32 [#allocation3], 4
          %s235 = int_to_ptr.vmem [resolvable:$true] %s234
          %237 = dma.hbm_to_vmem [thread:$0]  %s232, 128, %s235, [#allocation4]
        $region16: #{tpu_custom_call.1} parent=11 // pred_fallthru
          _
        // Predicated region
        $region17: #{tpu_custom_call.1} parent=11 // pred_check
          %p238 = pneg %p80
        $region18: #{tpu_custom_call.1} parent=11 // pred_check_branch
          %240 = sbr.rel (%p238) target = $region20
        $region19: #{tpu_custom_call.1} parent=11 // pred_region
          %p241 = scmp.lt.s32.totalorder %s26, 0
          %s242 = scalar_select %p241, %s26, 0
          %s243 = scalar_lea.vmem %s1, %s242
        $region20: #{tpu_custom_call.1} parent=11 // pred_fallthru
          _
      $region12: #{tpu_custom_call.1} parent=5 // pred_fallthru
        _
      %p244 = scmp.lt.s32.totalorder %s16, 2
      // Predicated region
      $region21: #{tpu_custom_call.1} parent=5 // pred_check
        %p245 = pneg %p244
      $region22: #{tpu_custom_call.1} parent=5 // pred_check_branch
        %247 = sbr.rel (%p245) target = $region24
      $region23: #{tpu_custom_call.1} parent=5 // pred_region
        // Predicated region
        $region25: #{tpu_custom_call.1} parent=23 // pred_check
          %p248 = pneg %p100
        $region26: #{tpu_custom_call.1} parent=23 // pred_check_branch
          %250 = sbr.rel (%p248) target = $region28
        $region27: #{tpu_custom_call.1} parent=23 // pred_region
          %p251 = scmp.lt.s32.totalorder %s23, 1
          %s252 = scalar_select %p251, %s23, 1
          %s253 = smul.addr %s252, 8
          %s254 = scalar_lea.vmem %s2, %s253
        $region28: #{tpu_custom_call.1} parent=23 // pred_fallthru
          _
        // Predicated region
        $region29: #{tpu_custom_call.1} parent=23 // pred_check
          %p255 = pneg %p126
        $region30: #{tpu_custom_call.1} parent=23 // pred_check_branch
          %257 = sbr.rel (%p255) target = $region32
        $region31: #{tpu_custom_call.1} parent=23 // pred_region
          %p258 = scmp.lt.s32.totalorder %s23, 1
          %s259 = scalar_select %p258, %s23, 1
          %s260 = smul.addr %s259, 8
          %s261 = scalar_lea.vmem %s3, %s260
        $region32: #{tpu_custom_call.1} parent=23 // pred_fallthru
          _
        // Predicated region
        $region33: #{tpu_custom_call.1} parent=23 // pred_check
          %p262 = pneg %p152
        $region34: #{tpu_custom_call.1} parent=23 // pred_check_branch
          %264 = sbr.rel (%p262) target = $region36
        $region35: #{tpu_custom_call.1} parent=23 // pred_region
          %p265 = scmp.lt.s32.totalorder %s23, 1
          %s266 = scalar_select %p265, %s23, 1
          %s267 = smul.addr %s266, 8
          %s268 = scalar_lea.vmem %s4, %s267
        $region36: #{tpu_custom_call.1} parent=23 // pred_fallthru
          _
        // Predicated region
        $region37: #{tpu_custom_call.1} parent=23 // pred_check
          %p269 = pneg %p178
        $region38: #{tpu_custom_call.1} parent=23 // pred_check_branch
          %271 = sbr.rel (%p269) target = $region40
        $region39: #{tpu_custom_call.1} parent=23 // pred_region
          %p272 = scmp.lt.s32.totalorder %s23, 1
          %s273 = scalar_select %p272, %s23, 1
          %s274 = smul.addr %s273, 8
          %s275 = scalar_lea.vmem %s5, %s274
        $region40: #{tpu_custom_call.1} parent=23 // pred_fallthru
          _
      $region24: #{tpu_custom_call.1} parent=5 // pred_fallthru
        _
      %p276 = scmp.le.s32.totalorder 1, %s16
      %p277 = scmp.lt.s32.totalorder %s16, 3
      %p278 = pnand %p276, %p277
      %p279 = pneg %p278
      // Predicated region
      $region41: #{tpu_custom_call.1} parent=5 // pred_check
        _
      $region42: #{tpu_custom_call.1} parent=5 // pred_check_branch
        %281 = sbr.rel (%p278) target = $region44
      $region43: #{tpu_custom_call.1} parent=5 // pred_region
        %s282 = ssub.s32 %s16, 1
        // Predicated region
        $region45: #{tpu_custom_call.1} parent=43 // pred_check
          %p283 = pneg %p54
        $region46: #{tpu_custom_call.1} parent=43 // pred_check_branch
          %285 = sbr.rel (%p283) target = $region48
        $region47: #{tpu_custom_call.1} parent=43 // pred_region
          %286 = dma.done [#allocation4], 128
        $region48: #{tpu_custom_call.1} parent=43 // pred_fallthru
          _
        %p287 = pneg %p54
        %p288 = pneg %p51
        %p289 = scmp.lt.s32.totalorder %s26, 0
        %s290 = scalar_select %p289, %s26, 0
        %s291 = scalar_lea.vmem %s1, %s290
        %p292 = pneg %p80
        %p293 = pneg %p77
        %p294 = scmp.lt.s32.totalorder %s25, 1
        %s295 = scalar_select %p294, %s25, 1
        %s296 = smul.addr %s295, 8
        %s297 = scalar_lea.vmem %s2, %s296
        %p298 = pneg %p106
        %p299 = pneg %p103
        %p300 = scmp.lt.s32.totalorder %s25, 1
        %s301 = scalar_select %p300, %s25, 1
        %s302 = smul.addr %s301, 8
        %s303 = scalar_lea.vmem %s3, %s302
        %p304 = pneg %p132
        %p305 = pneg %p129
        %p306 = scmp.lt.s32.totalorder %s25, 1
        %s307 = scalar_select %p306, %s25, 1
        %s308 = smul.addr %s307, 8
        %s309 = scalar_lea.vmem %s4, %s308
        %p310 = pneg %p158
        %p311 = pneg %p155
        %p312 = scmp.lt.s32.totalorder %s25, 1
        %s313 = scalar_select %p312, %s25, 1
        %s314 = smul.addr %s313, 8
        %s315 = scalar_lea.vmem %s5, %s314
        %p316 = pneg %p184
        %p317 = pneg %p181
        %p318 = pneg %p210
        %p319 = pneg %p207
        %s320 = sand.u32 %s197, 1
        %s321 = scalar_lea.sflag [#allocation5], %s320
        %s322 = sand.u32 %s197, 1
        %s323 = smul.addr %s322, 8
        %s324 = scalar_lea.vmem [#allocation6], %s323
        %p325 = scmp.lt.s32.totalorder %s26, 0
        %s326 = scalar_select %p325, %s26, 0
        %s327 = scalar_lea.vmem %s1, %s326
        %p328 = scmp.lt.s32.totalorder %s25, 1
        %s329 = scalar_select %p328, %s25, 1
        %s330 = smul.addr %s329, 8
        %s331 = scalar_lea.vmem %s2, %s330
        %p332 = scmp.lt.s32.totalorder %s25, 1
        %s333 = scalar_select %p332, %s25, 1
        %s334 = smul.addr %s333, 8
        %s335 = scalar_lea.vmem %s3, %s334
        %p336 = scmp.lt.s32.totalorder %s25, 1
        %s337 = scalar_select %p336, %s25, 1
        %s338 = smul.addr %s337, 8
        %s339 = scalar_lea.vmem %s4, %s338
        %p340 = scmp.lt.s32.totalorder %s25, 1
        %s341 = scalar_select %p340, %s25, 1
        %s342 = smul.addr %s341, 8
        %s343 = scalar_lea.vmem %s5, %s342
        %p344 = scmp.eq.s32.totalorder %s26, 0
        // Predicated region
        $region49: #{tpu_custom_call.1} parent=43 // pred_check
          %p345 = pneg %p344
        $region50: #{tpu_custom_call.1} parent=43 // pred_check_branch
          %347 = sbr.rel (%p345) target = $region52
        $region51: #{tpu_custom_call.1} parent=43 // pred_region
          %vm348 = vcmask 261120
          %349 = vst.msk [vmem:[#allocation2] sm:$0xff] %vm348, 0.0
        $region52: #{tpu_custom_call.1} parent=43 // pred_fallthru
          _
        %v350 = vld [vmem:[#allocation3] sm:$0xff]
        %v351 = vld [vmem:[%s331] sm:$0xff]
        %v352 = vld [vmem:[%s335] sm:$0xff]
        %354 = vset.pattern.permute.xlu0 0
        %355 = vperm.xlu0 %354, %v352
        %v356 = vpop.permute.xlu0 %355
        %vm358 = vcmask 261120
        %v360 = vsel %vm358, %v351, 0
        %v363 = vsel %vm358, %v350, 0
        %365 = vmatprep.subr.mxu0 0.0
        %366 = vmatpush1.xpose.msra.mxu0 0.0
        %367 = vmatprep.subr.mxu0 0.0
        %368 = vmatpush1.xpose.msra.mxu0 0.0
        %369 = vmatprep.subr.mxu0 0.0
        %370 = vmatpush1.xpose.msra.mxu0 0.0
        %371 = vmatprep.subr.mxu0 0.0
        %372 = vmatpush1.xpose.msra.mxu0 0.0
        %373 = vmatprep.subr.mxu0 0.0
        %374 = vmatpush1.xpose.msra.mxu0 0.0
        %375 = vmatprep.subr.mxu0 0.0
        %376 = vmatpush1.xpose.msra.mxu0 0.0
        %377 = vmatprep.subr.mxu0 0.0
        %378 = vmatpush1.xpose.msra.mxu0 0.0
        %379 = vmatprep.subr.mxu0 0.0
        %380 = vmatpush1.xpose.msra.mxu0 0.0
        %381 = vmatprep.subr.mxu0 0.0
        %382 = vmatpush1.xpose.msra.mxu0 0.0
        %383 = vmatprep.subr.mxu0 0.0
        %384 = vmatpush1.xpose.msra.mxu0 0.0
        %385 = vmatprep.subr.mxu0 0.0
        %386 = vmatpush1.xpose.msra.mxu0 0.0
        %387 = vmatprep.subr.mxu0 0.0
        %388 = vmatpush1.xpose.msra.mxu0 0.0
        %389 = vmatprep.subr.mxu0 0.0
        %390 = vmatpush1.xpose.msra.mxu0 0.0
        %391 = vmatprep.subr.mxu0 0.0
        %392 = vmatpush1.xpose.msra.mxu0 0.0
        %393 = vmatprep.subr.mxu0 0.0
        %394 = vmatpush1.xpose.msra.mxu0 0.0
        %395 = vmatprep.subr.mxu0 0.0
        %396 = vmatpush1.xpose.msra.mxu0 %v363
        %397 = vmatprep.subr.mxu0 0.0
        %398 = vmatpush2.xpose.msra.mxu0 0.0
        %399 = vmatprep.subr.mxu0 0.0
        %400 = vmatpush2.xpose.msra.mxu0 0.0
        %401 = vmatprep.subr.mxu0 0.0
        %402 = vmatpush2.xpose.msra.mxu0 0.0
        %403 = vmatprep.subr.mxu0 0.0
        %404 = vmatpush2.xpose.msra.mxu0 0.0
        %405 = vmatprep.subr.mxu0 0.0
        %406 = vmatpush2.xpose.msra.mxu0 0.0
        %407 = vmatprep.subr.mxu0 0.0
        %408 = vmatpush2.xpose.msra.mxu0 0.0
        %409 = vmatprep.subr.mxu0 0.0
        %410 = vmatpush2.xpose.msra.mxu0 0.0
        %411 = vmatprep.subr.mxu0 0.0
        %412 = vmatpush2.xpose.msra.mxu0 0.0
        %413 = vmatprep.subr.mxu0 0.0
        %414 = vmatpush2.xpose.msra.mxu0 0.0
        %415 = vmatprep.subr.mxu0 0.0
        %416 = vmatpush2.xpose.msra.mxu0 0.0
        %417 = vmatprep.subr.mxu0 0.0
        %418 = vmatpush2.xpose.msra.mxu0 0.0
        %419 = vmatprep.subr.mxu0 0.0
        %420 = vmatpush2.xpose.msra.mxu0 0.0
        %421 = vmatprep.subr.mxu0 0.0
        %422 = vmatpush2.xpose.msra.mxu0 0.0
        %423 = vmatprep.subr.mxu0 0.0
        %424 = vmatpush2.xpose.msra.mxu0 0.0
        %425 = vmatprep.subr.mxu0 0.0
        %426 = vmatpush2.xpose.msra.mxu0 0.0
        %427 = vmatprep.subr.mxu0 0.0
        %428 = vmatpush2.xpose.msra.mxu0 0.0
        %429 = vmatprep.mubr.f32.mxu0 0.0
        %430 = vmatmul.mubr.f32.gmra.mxu0 %v360
        %v431 = vpop.f32.mrf.mxu0
        %v432 = vadd.f32 %v356, %v431
        %v433 = vpop.f32.mrf.mxu0
        %434 = vdwg.mxu0
        %v435 = vxor.u32 %v432, 2147483648
        %v436 = vmul.f32 %v435, 1.442695
        %v437 = vpow.pop %v436
        %v438 = vadd.f32 %v437, 1.0
        %v439 = vrcp.pop %v438
        %v440 = vmul.f32 1.0, %v439
        %v441 = vld [vmem:[%s327] sm:$0x1]
        %v443 = vlaneseq
        %v444 = vshrl.u32 %v443, 7
        %v445 = vsub.s32 0, %v444
        %v446 = vrot.slane %v441, %v445
        %v448 = vmul.f32 %v440, %v446
        %v449 = vld [vmem:[#allocation2] sm:$0xff]
        %vm450 = vcmask 64512
        %v452 = vsel %vm450, %v448, 0
        %454 = vmatprep.subr.mxu0 0.0
        %455 = vmatpush1.msra.mxu0 0.0
        %456 = vmatprep.subr.mxu0 0.0
        %457 = vmatpush1.msra.mxu0 0.0
        %458 = vmatprep.subr.mxu0 0.0
        %459 = vmatpush1.msra.mxu0 0.0
        %460 = vmatprep.subr.mxu0 0.0
        %461 = vmatpush1.msra.mxu0 0.0
        %462 = vmatprep.subr.mxu0 0.0
        %463 = vmatpush1.msra.mxu0 0.0
        %464 = vmatprep.subr.mxu0 0.0
        %465 = vmatpush1.msra.mxu0 0.0
        %466 = vmatprep.subr.mxu0 0.0
        %467 = vmatpush1.msra.mxu0 0.0
        %468 = vmatprep.subr.mxu0 0.0
        %469 = vmatpush1.msra.mxu0 0.0
        %470 = vmatprep.subr.mxu0 0.0
        %471 = vmatpush1.msra.mxu0 0.0
        %472 = vmatprep.subr.mxu0 0.0
        %473 = vmatpush1.msra.mxu0 0.0
        %474 = vmatprep.subr.mxu0 0.0
        %475 = vmatpush1.msra.mxu0 0.0
        %476 = vmatprep.subr.mxu0 0.0
        %477 = vmatpush1.msra.mxu0 0.0
        %478 = vmatprep.subr.mxu0 0.0
        %479 = vmatpush1.msra.mxu0 0.0
        %480 = vmatprep.subr.mxu0 0.0
        %481 = vmatpush1.msra.mxu0 0.0
        %482 = vmatprep.subr.mxu0 0.0
        %483 = vmatpush1.msra.mxu0 0.0
        %484 = vmatprep.subr.mxu0 0.0
        %485 = vmatpush1.msra.mxu0 %v350
        %486 = vmatprep.subr.mxu0 0.0
        %487 = vmatpush2.msra.mxu0 0.0
        %488 = vmatprep.subr.mxu0 0.0
        %489 = vmatpush2.msra.mxu0 0.0
        %490 = vmatprep.subr.mxu0 0.0
        %491 = vmatpush2.msra.mxu0 0.0
        %492 = vmatprep.subr.mxu0 0.0
        %493 = vmatpush2.msra.mxu0 0.0
        %494 = vmatprep.subr.mxu0 0.0
        %495 = vmatpush2.msra.mxu0 0.0
        %496 = vmatprep.subr.mxu0 0.0
        %497 = vmatpush2.msra.mxu0 0.0
        %498 = vmatprep.subr.mxu0 0.0
        %499 = vmatpush2.msra.mxu0 0.0
        %500 = vmatprep.subr.mxu0 0.0
        %501 = vmatpush2.msra.mxu0 0.0
        %502 = vmatprep.subr.mxu0 0.0
        %503 = vmatpush2.msra.mxu0 0.0
        %504 = vmatprep.subr.mxu0 0.0
        %505 = vmatpush2.msra.mxu0 0.0
        %506 = vmatprep.subr.mxu0 0.0
        %507 = vmatpush2.msra.mxu0 0.0
        %508 = vmatprep.subr.mxu0 0.0
        %509 = vmatpush2.msra.mxu0 0.0
        %510 = vmatprep.subr.mxu0 0.0
        %511 = vmatpush2.msra.mxu0 0.0
        %512 = vmatprep.subr.mxu0 0.0
        %513 = vmatpush2.msra.mxu0 0.0
        %514 = vmatprep.subr.mxu0 0.0
        %515 = vmatpush2.msra.mxu0 0.0
        %516 = vmatprep.subr.mxu0 0.0
        %517 = vmatpush2.msra.mxu0 0.0
        %518 = vmatprep.mubr.f32.mxu0 0.0
        %519 = vmatmul.mubr.f32.gmra.mxu0 %v452
        %v520 = vpop.f32.mrf.mxu0
        %v521 = vadd.f32 0.0, %v520
        %v522 = vpop.f32.mrf.mxu0
        %523 = vdwg.mxu0
        %v524 = vadd.f32 %v449, %v521
        %525 = vst.msk [vmem:[#allocation2] sm:$0xff] %vm358, %v524
        // Predicated region
        $region53: #{tpu_custom_call.1} parent=43 // pred_check
          %p526 = pneg %p344
        $region54: #{tpu_custom_call.1} parent=43 // pred_check_branch
          %528 = sbr.rel (%p526) target = $region56
        $region55: #{tpu_custom_call.1} parent=43 // pred_region
          %v529 = vld [vmem:[%s339] sm:$0xff]
          %v530 = vld [vmem:[%s343] sm:$0xff]
          %v531 = vld [vmem:[#allocation2] sm:$0xff]
          %533 = vset.pattern.permute.xlu0 0
          %534 = vperm.xlu0 %533, %v530
          %v535 = vpop.permute.xlu0 %534
          %v537 = vmul.f32 %v535, %v531
          %v538 = vsub.f32 %v529, %v537
          %v539 = vmul.f32 %v538, %v538
          %540 = vst.msk [vmem:[%s324] sm:$0xff] %vm358, %v539
        $region56: #{tpu_custom_call.1} parent=43 // pred_fallthru
          _
        %s541 = sand.u32 %s197, 1
        %s542 = scalar_lea.sflag [#allocation5], %s541
        %s543 = sand.u32 %s197, 1
        %s544 = smul.addr %s543, 8
        %s545 = scalar_lea.vmem [#allocation6], %s544
        // Predicated region
        $region57: #{tpu_custom_call.1} parent=43 // pred_check
          %p546 = pneg %p207
        $region58: #{tpu_custom_call.1} parent=43 // pred_check_branch
          %548 = sbr.rel (%p546) target = $region60
        $region59: #{tpu_custom_call.1} parent=43 // pred_region
          %s550 = ssub.s32 128, 128
          %551 = vsyncadd %s542, %s550
          %s552 = smul.addr %s25, 128
          %s553 = scalar_lea.hbm %s6, %s552
          %s555 = sshll.u32 %s545, 4
          %s556 = int_to_ptr.vmem [resolvable:$true] %s555
          %558 = dma.vmem_to_hbm [thread:$0]  %s556, 128, %s553, %s542
        $region60: #{tpu_custom_call.1} parent=43 // pred_fallthru
          _
      $region44: #{tpu_custom_call.1} parent=5 // pred_fallthru
        _
      %p559 = scmp.le.s32.totalorder 2, %s16
      // Predicated region
      $region61: #{tpu_custom_call.1} parent=5 // pred_check
        %p560 = pneg %p559
      $region62: #{tpu_custom_call.1} parent=5 // pred_check_branch
        %562 = sbr.rel (%p560) target = $region64
      $region63: #{tpu_custom_call.1} parent=5 // pred_region
        %s563 = ssub.s32 %s16, 2
        // Predicated region
        $region65: #{tpu_custom_call.1} parent=63 // pred_check
          %p564 = pneg %p213
        $region66: #{tpu_custom_call.1} parent=63 // pred_check_branch
          %566 = sbr.rel (%p564) target = $region68
        $region67: #{tpu_custom_call.1} parent=63 // pred_region
          %s567 = sand.u32 %s198, 1
          %s568 = scalar_lea.sflag [#allocation5], %s567
          %s569 = sand.u32 %s198, 1
          %s570 = smul.addr %s569, 8
          %s571 = scalar_lea.vmem [#allocation6], %s570
          %572 = dma.done %s568, 128
        $region68: #{tpu_custom_call.1} parent=63 // pred_fallthru
          _
      $region64: #{tpu_custom_call.1} parent=5 // pred_fallthru
        _
    $region6: #{tpu_custom_call.1} parent=1 // loop_footer
      %s20 = sadd.s32 1, %s16
    $region7: #{tpu_custom_call.1} parent=1 // loop_footer_branch
      %15 = sbr.rel target = $region3
    $region8: #{tpu_custom_call.1} parent=1 // loop_exit
      _
    %573 = vsyncpa [#allocation4], 1
    %s574 = scalar_lea.sflag [#allocation4], 1
    %575 = vsyncpa %s574, 1
    %576 = vsyncpa [#allocation5], 1
    %s577 = scalar_lea.sflag [#allocation5], 1
    %578 = vsyncpa %s577, 1

</llo_original>
